<compile_context>
chip_gen: v6e
topology: v6e:2x2x1
jax: 0.10.0
libtpu: 0.0.40
codegen_flags: <defaults>
</compile_context>

<pallas_src>
import functools
import itertools

import numpy as np
import jax
import jax.numpy as jnp
from jax.experimental import pallas as pl
from jax.experimental.pallas import tpu as pltpu


# Older jax releases used the name TPUCompilerParams.
_CompilerParams = getattr(pltpu, "CompilerParams", None) or getattr(
    pltpu, "TPUCompilerParams")


def _make_edge_geometry(connection_window: np.ndarray):
    """Mirror GLRFast.__init__ edge bookkeeping."""
    window_size = connection_window.shape[0]
    cw_flat = connection_window.reshape(-1)
    m = np.arange(window_size) - window_size // 2
    edge_delta = np.array(list(itertools.product(m, m)), dtype=np.int32)
    edge_delta = edge_delta[cw_flat == 1]
    pad_dim_hw = np.abs(edge_delta.min(axis=0))
    return edge_delta, pad_dim_hw


def _vmem_capacity_bytes():
    try:
        return int(pltpu.get_tpu_info().vmem_capacity_bytes)
    except Exception:
        return 64 * 1024 * 1024  # conservative (v7x-sized) fallback


def _glr_kernel(masks_ref, x_ref, w_ref, o_ref, *, edge_delta, H, W, TC):
    """One (b*g)-chunk.

    masks_ref : (4, HW)      f32 {0,1}: [row==0, row==H-1, col==0, col==W-1]
    x_ref     : (TB, C, HW)  signal (bf16 or f32), HW = H*W on the lane axis
    w_ref     : (TB, E, HW)  edge weights (bf16 or f32), reused by all channels
    o_ref     : (TB, C, HW)  f32 output
    """
    TB, C, HW = x_ref.shape

    def fixup_shift(v, shift, mask_row):
        # out[p] = v[(p + k) mod HW] with shift = (-k) mod HW, then replicate
        # ("edge") padding fixup: lanes flagged by masks_ref[mask_row] keep
        # their original value.
        if shift == 0:
            return v
        rolled = pltpu.roll(v, shift, axis=1)
        m = masks_ref[mask_row:mask_row + 1, :]          # (1, HW) sublane bcast
        return rolled + m * (v - rolled)

    def neighbor(v, dh, dw):
        # v at (clamp(h+dh), clamp(w+dw)) built from single-row / single-column
        # clamped shifts (correct for any window size, clamps compose).
        for _ in range(abs(int(dh))):
            v = (fixup_shift(v, (HW - W) % HW, 1) if dh > 0
                 else fixup_shift(v, W % HW, 0))
        for _ in range(abs(int(dw))):
            v = (fixup_shift(v, (HW - 1) % HW, 3) if dw > 0
                 else fixup_shift(v, 1 % HW, 2))
        return v

    for t in range(TB):                       # static unroll over rows in block
        for c0 in range(0, C, TC):            # channel sub-tiles bound vreg use
            x = x_ref[t, c0:c0 + TC, :].astype(jnp.float32)      # (TC, HW)
            acc = x                                              # out = x - Wx
            for e, (dh, dw) in enumerate(edge_delta):
                nb = neighbor(x, dh, dw)
                w_e = w_ref[t, e:e + 1, :].astype(jnp.float32)   # (1, HW)
                acc = acc - w_e * nb
            o_ref[t, c0:c0 + TC, :] = acc


def glr_fast_forward(patchs, edge_weights, node_degree, *, connection_window,
                     transfer_dtype=jnp.bfloat16):
    """GLRFast.forward == op_L_norm(patchs, edge_weights, node_degree).

    patchs       : (B, G, C, H, W) float32
    edge_weights : (B, G, E, H, W) float32
    node_degree  : unused by the forward pass (signature parity)
    returns      : (B, G, C, H, W) float32
    """
    del node_degree  # not used by the PyTorch forward either
    edge_delta, _ = _make_edge_geometry(connection_window)
    E = edge_delta.shape[0]

    B, G, C, H, W = patchs.shape
    assert edge_weights.shape == (B, G, E, H, W)
    N = B * G
    HW = H * W

    # Contiguous reshapes only (no transposes); bf16 transfer per perf review.
    # In a full model the producers would already emit these dtypes/layouts.
    x_r = patchs.reshape(N, C, HW).astype(transfer_dtype)
    w_r = edge_weights.reshape(N, E, HW).astype(transfer_dtype)

    # Replicate-padding boundary fixup masks over the flattened lane axis.
    lane = np.arange(HW, dtype=np.int64)
    row, col = lane // W, lane % W
    fix_masks = jnp.asarray(np.stack([
        row == 0, row == H - 1, col == 0, col == W - 1,
    ]).astype(np.float32))                                        # (4, HW)

    # ---- tile sizing --------------------------------------------------------
    LIVE_ELEMS = 8 * 1024       # ~8 vregs per live f32 value (vreg pressure)
    MAX_UNROLL = 16

    TC = 1                      # channel sub-tile (in-kernel)
    for d in range(C, 0, -1):
        if C % d == 0 and d * HW <= LIVE_ELEMS:
            TC = d
            break
    n_sub = C // TC

    vmem_cap = _vmem_capacity_bytes()
    budget = int(0.45 * vmem_cap)                 # ~0.4-0.5x capacity for blocks
    ib = jnp.dtype(transfer_dtype).itemsize
    per_n = 2 * (C * HW * ib + E * HW * ib + C * HW * 4)   # dbl-buffered x,w,out
    cap = max(1, min(budget // per_n, max(1, MAX_UNROLL // n_sub), N))
    if N > 1:
        cap = min(cap, max(1, N // 2))            # >=2 grid steps (v7x megacore)
    TB = 1
    for d in range(cap, 0, -1):                   # TB divides N -> no OOB blocks
        if N % d == 0:
            TB = d
            break
    grid_n = N // TB

    need = per_n * TB + 2 * 4 * HW * 4
    vmem_limit = int(min(int(0.8 * vmem_cap), max(32 * 1024 * 1024, 4 * need)))

    kernel = functools.partial(
        _glr_kernel,
        edge_delta=tuple((int(dh), int(dw)) for dh, dw in edge_delta),
        H=H, W=W, TC=TC,
    )

    out_r = pl.pallas_call(
        kernel,
        out_shape=jax.ShapeDtypeStruct((N, C, HW), jnp.float32),
        grid=(grid_n,),
        in_specs=[
            pl.BlockSpec((4, HW), lambda i: (0, 0)),          # fixup masks
            pl.BlockSpec((TB, C, HW), lambda i: (i, 0, 0)),   # signal chunk
            pl.BlockSpec((TB, E, HW), lambda i: (i, 0, 0)),   # edge weights
        ],
        out_specs=pl.BlockSpec((TB, C, HW), lambda i: (i, 0, 0)),
        compiler_params=_CompilerParams(
            dimension_semantics=("parallel",),
            vmem_limit_bytes=vmem_limit,
        ),
    )(fix_masks, x_r, w_r)

    return out_r.reshape(B, G, C, H, W)


def _reference_forward(patchs, edge_weights, connection_window):
    """Pure-JAX reference matching the PyTorch op_L_norm (no MXU precision ambiguity)."""
    edge_delta, pad_dim_hw = _make_edge_geometry(connection_window)
    padH, padW = int(pad_dim_hw[0]), int(pad_dim_hw[1])
    B, G, C, H, W = patchs.shape
    E = edge_delta.shape[0]
    x = patchs.reshape(B, G * C, H, W)
    xp = jnp.pad(x, ((0, 0), (0, 0), (padH, padH), (padW, padW)), mode="edge")
    neighbors = jnp.stack(
        [xp[:, :, padH + dh:padH + dh + H, padW + dw:padW + dw + W]
         for dh, dw in edge_delta], axis=2)                   # (B, G*C, E, H, W)
    neighbors = neighbors.reshape(B, G, C, E, H, W)
    Wx = (neighbors * edge_weights[:, :, None, :, :, :]).sum(axis=3)
    return patchs - Wx


if __name__ == "__main__":
    # Module config (deterministic, synthetic).
    n_channels = 4
    n_node_fts = 8        # used only by edge-weight extraction, not forward
    n_graphs = 2
    connection_window = np.ones((3, 3), dtype=np.int32)   # 8-connected + self => 9 edges
    M_diag_init = 0.4

    edge_delta, _ = _make_edge_geometry(connection_window)
    n_edges = edge_delta.shape[0]

    # Parameter from __init__ (unused by forward, initialized deterministically).
    multiM = jnp.ones((n_graphs, n_node_fts), jnp.float32) * M_diag_init  # noqa: F841

    B, H, W = 2, 16, 16
    key = jax.random.PRNGKey(0)
    k1, k2, k3 = jax.random.split(key, 3)
    patchs = jax.random.normal(k1, (B, n_graphs, n_channels, H, W), jnp.float32)
    edge_weights = jax.random.uniform(k2, (B, n_graphs, n_edges, H, W), jnp.float32)
    node_degree = jax.random.uniform(k3, (B, n_graphs, H, W), jnp.float32) + 1.0

    # 1) default path: bf16 HBM streams, f32 accumulate/output.
    out = glr_fast_forward(patchs, edge_weights, node_degree,
                           connection_window=connection_window)
    out = jax.block_until_ready(out)
    assert out.shape == (B, n_graphs, n_channels, H, W)
    assert out.dtype == jnp.float32
    xq = patchs.astype(jnp.bfloat16).astype(jnp.float32)
    wq = edge_weights.astype(jnp.bfloat16).astype(jnp.float32)
    ref_bf16 = _reference_forward(xq, wq, connection_window)
    assert jnp.allclose(out, ref_bf16, atol=1e-3, rtol=1e-3), "bf16 path mismatch"

    # 2) exactness check: f32 transfer path against the f32 reference.
    out_f32 = glr_fast_forward(patchs, edge_weights, node_degree,
                               connection_window=connection_window,
                               transfer_dtype=jnp.float32)
    out_f32 = jax.block_until_ready(out_f32)
    ref_f32 = _reference_forward(patchs, edge_weights, connection_window)
    assert jnp.allclose(out_f32, ref_f32, atol=1e-4, rtol=1e-4), "f32 path mismatch"

    print("KERNEL_OK")
</pallas_src>

<mosaic_0001>
module attributes {stable_mosaic.version = 11 : i64} {
  func.func @_glr_kernel(%arg0: i32, %arg1: memref<4x256xf32, #tpu.memory_space<vmem>>, %arg2: memref<2x4x256xbf16, #tpu.memory_space<vmem>>, %arg3: memref<2x9x256xbf16, #tpu.memory_space<vmem>>, %arg4: memref<2x4x256xf32, #tpu.memory_space<vmem>>) attributes {dimension_semantics = [#tpu.dimension_semantics<parallel>], iteration_bounds = array<i64: 2>, scalar_prefetch = 0 : i64, scratch_operands = 0 : i64, tpu.core_type = #tpu.core_type<tc>, window_params = [{pipeline_mode = #tpu.pipeline_mode<synchronous>, transform_indices = @transform_0, window_bounds = array<i64: 4, 256>}, {transform_indices = @transform_1, window_bounds = array<i64: 2, 4, 256>}, {transform_indices = @transform_2, window_bounds = array<i64: 2, 9, 256>}, {transform_indices = @transform_3, window_bounds = array<i64: 2, 4, 256>}]} {
    %c0 = arith.constant 0 : index
    %c0_0 = arith.constant 0 : index
    %c0_1 = arith.constant 0 : index
    %0 = vector.load %arg2[%c0, %c0_0, %c0_1] : memref<2x4x256xbf16, #tpu.memory_space<vmem>>, vector<1x4x256xbf16>
    %1 = vector.shape_cast %0 : vector<1x4x256xbf16> to vector<4x256xbf16>
    %2 = arith.extf %1 : vector<4x256xbf16> to vector<4x256xf32>
    %c16_i32 = arith.constant 16 : i32
    %3 = tpu.dynamic_rotate %2 by %c16_i32 dim 1 : vector<4x256xf32>, i32 -> vector<4x256xf32>
    %c0_2 = arith.constant 0 : index
    %c0_3 = arith.constant 0 : index
    %4 = vector.load %arg1[%c0_2, %c0_3] : memref<4x256xf32, #tpu.memory_space<vmem>>, vector<1x256xf32>
    %5 = arith.subf %2, %3 : vector<4x256xf32>
    %6 = vector.broadcast %4 : vector<1x256xf32> to vector<4x256xf32>
    %7 = arith.mulf %6, %5 : vector<4x256xf32>
    %8 = arith.addf %3, %7 : vector<4x256xf32>
    %c1_i32 = arith.constant 1 : i32
    %9 = tpu.dynamic_rotate %8 by %c1_i32 dim 1 : vector<4x256xf32>, i32 -> vector<4x256xf32>
    %c2 = arith.constant 2 : index
    %c0_4 = arith.constant 0 : index
    %10 = vector.load %arg1[%c2, %c0_4] : memref<4x256xf32, #tpu.memory_space<vmem>>, vector<1x256xf32>
    %11 = arith.subf %8, %9 : vector<4x256xf32>
    %12 = vector.broadcast %10 : vector<1x256xf32> to vector<4x256xf32>
    %13 = arith.mulf %12, %11 : vector<4x256xf32>
    %14 = arith.addf %9, %13 : vector<4x256xf32>
    %c0_5 = arith.constant 0 : index
    %c0_6 = arith.constant 0 : index
    %c0_7 = arith.constant 0 : index
    %15 = vector.load %arg3[%c0_5, %c0_6, %c0_7] : memref<2x9x256xbf16, #tpu.memory_space<vmem>>, vector<1x1x256xbf16>
    %16 = vector.shape_cast %15 : vector<1x1x256xbf16> to vector<1x256xbf16>
    %17 = arith.extf %16 : vector<1x256xbf16> to vector<1x256xf32>
    %18 = vector.broadcast %17 : vector<1x256xf32> to vector<4x256xf32>
    %19 = arith.mulf %18, %14 : vector<4x256xf32>
    %20 = arith.subf %2, %19 : vector<4x256xf32>
    %c16_i32_8 = arith.constant 16 : i32
    %21 = tpu.dynamic_rotate %2 by %c16_i32_8 dim 1 : vector<4x256xf32>, i32 -> vector<4x256xf32>
    %c0_9 = arith.constant 0 : index
    %c0_10 = arith.constant 0 : index
    %22 = vector.load %arg1[%c0_9, %c0_10] : memref<4x256xf32, #tpu.memory_space<vmem>>, vector<1x256xf32>
    %23 = arith.subf %2, %21 : vector<4x256xf32>
    %24 = vector.broadcast %22 : vector<1x256xf32> to vector<4x256xf32>
    %25 = arith.mulf %24, %23 : vector<4x256xf32>
    %26 = arith.addf %21, %25 : vector<4x256xf32>
    %c0_11 = arith.constant 0 : index
    %c1 = arith.constant 1 : index
    %c0_12 = arith.constant 0 : index
    %27 = vector.load %arg3[%c0_11, %c1, %c0_12] : memref<2x9x256xbf16, #tpu.memory_space<vmem>>, vector<1x1x256xbf16>
    %28 = vector.shape_cast %27 : vector<1x1x256xbf16> to vector<1x256xbf16>
    %29 = arith.extf %28 : vector<1x256xbf16> to vector<1x256xf32>
    %30 = vector.broadcast %29 : vector<1x256xf32> to vector<4x256xf32>
    %31 = arith.mulf %30, %26 : vector<4x256xf32>
    %32 = arith.subf %20, %31 : vector<4x256xf32>
    %c16_i32_13 = arith.constant 16 : i32
    %33 = tpu.dynamic_rotate %2 by %c16_i32_13 dim 1 : vector<4x256xf32>, i32 -> vector<4x256xf32>
    %c0_14 = arith.constant 0 : index
    %c0_15 = arith.constant 0 : index
    %34 = vector.load %arg1[%c0_14, %c0_15] : memref<4x256xf32, #tpu.memory_space<vmem>>, vector<1x256xf32>
    %35 = arith.subf %2, %33 : vector<4x256xf32>
    %36 = vector.broadcast %34 : vector<1x256xf32> to vector<4x256xf32>
    %37 = arith.mulf %36, %35 : vector<4x256xf32>
    %38 = arith.addf %33, %37 : vector<4x256xf32>
    %c255_i32 = arith.constant 255 : i32
    %39 = tpu.dynamic_rotate %38 by %c255_i32 dim 1 : vector<4x256xf32>, i32 -> vector<4x256xf32>
    %c3 = arith.constant 3 : index
    %c0_16 = arith.constant 0 : index
    %40 = vector.load %arg1[%c3, %c0_16] : memref<4x256xf32, #tpu.memory_space<vmem>>, vector<1x256xf32>
    %41 = arith.subf %38, %39 : vector<4x256xf32>
    %42 = vector.broadcast %40 : vector<1x256xf32> to vector<4x256xf32>
    %43 = arith.mulf %42, %41 : vector<4x256xf32>
    %44 = arith.addf %39, %43 : vector<4x256xf32>
    %c0_17 = arith.constant 0 : index
    %c2_18 = arith.constant 2 : index
    %c0_19 = arith.constant 0 : index
    %45 = vector.load %arg3[%c0_17, %c2_18, %c0_19] : memref<2x9x256xbf16, #tpu.memory_space<vmem>>, vector<1x1x256xbf16>
    %46 = vector.shape_cast %45 : vector<1x1x256xbf16> to vector<1x256xbf16>
    %47 = arith.extf %46 : vector<1x256xbf16> to vector<1x256xf32>
    %48 = vector.broadcast %47 : vector<1x256xf32> to vector<4x256xf32>
    %49 = arith.mulf %48, %44 : vector<4x256xf32>
    %50 = arith.subf %32, %49 : vector<4x256xf32>
    %c1_i32_20 = arith.constant 1 : i32
    %51 = tpu.dynamic_rotate %2 by %c1_i32_20 dim 1 : vector<4x256xf32>, i32 -> vector<4x256xf32>
    %c2_21 = arith.constant 2 : index
    %c0_22 = arith.constant 0 : index
    %52 = vector.load %arg1[%c2_21, %c0_22] : memref<4x256xf32, #tpu.memory_space<vmem>>, vector<1x256xf32>
    %53 = arith.subf %2, %51 : vector<4x256xf32>
    %54 = vector.broadcast %52 : vector<1x256xf32> to vector<4x256xf32>
    %55 = arith.mulf %54, %53 : vector<4x256xf32>
    %56 = arith.addf %51, %55 : vector<4x256xf32>
    %c0_23 = arith.constant 0 : index
    %c3_24 = arith.constant 3 : index
    %c0_25 = arith.constant 0 : index
    %57 = vector.load %arg3[%c0_23, %c3_24, %c0_25] : memref<2x9x256xbf16, #tpu.memory_space<vmem>>, vector<1x1x256xbf16>
    %58 = vector.shape_cast %57 : vector<1x1x256xbf16> to vector<1x256xbf16>
    %59 = arith.extf %58 : vector<1x256xbf16> to vector<1x256xf32>
    %60 = vector.broadcast %59 : vector<1x256xf32> to vector<4x256xf32>
    %61 = arith.mulf %60, %56 : vector<4x256xf32>
    %62 = arith.subf %50, %61 : vector<4x256xf32>
    %c0_26 = arith.constant 0 : index
    %c4 = arith.constant 4 : index
    %c0_27 = arith.constant 0 : index
    %63 = vector.load %arg3[%c0_26, %c4, %c0_27] : memref<2x9x256xbf16, #tpu.memory_space<vmem>>, vector<1x1x256xbf16>
    %64 = vector.shape_cast %63 : vector<1x1x256xbf16> to vector<1x256xbf16>
    %65 = arith.extf %64 : vector<1x256xbf16> to vector<1x256xf32>
    %66 = vector.broadcast %65 : vector<1x256xf32> to vector<4x256xf32>
    %67 = arith.mulf %66, %2 : vector<4x256xf32>
    %68 = arith.subf %62, %67 : vector<4x256xf32>
    %c255_i32_28 = arith.constant 255 : i32
    %69 = tpu.dynamic_rotate %2 by %c255_i32_28 dim 1 : vector<4x256xf32>, i32 -> vector<4x256xf32>
    %c3_29 = arith.constant 3 : index
    %c0_30 = arith.constant 0 : index
    %70 = vector.load %arg1[%c3_29, %c0_30] : memref<4x256xf32, #tpu.memory_space<vmem>>, vector<1x256xf32>
    %71 = arith.subf %2, %69 : vector<4x256xf32>
    %72 = vector.broadcast %70 : vector<1x256xf32> to vector<4x256xf32>
    %73 = arith.mulf %72, %71 : vector<4x256xf32>
    %74 = arith.addf %69, %73 : vector<4x256xf32>
    %c0_31 = arith.constant 0 : index
    %c5 = arith.constant 5 : index
    %c0_32 = arith.constant 0 : index
    %75 = vector.load %arg3[%c0_31, %c5, %c0_32] : memref<2x9x256xbf16, #tpu.memory_space<vmem>>, vector<1x1x256xbf16>
    %76 = vector.shape_cast %75 : vector<1x1x256xbf16> to vector<1x256xbf16>
    %77 = arith.extf %76 : vector<1x256xbf16> to vector<1x256xf32>
    %78 = vector.broadcast %77 : vector<1x256xf32> to vector<4x256xf32>
    %79 = arith.mulf %78, %74 : vector<4x256xf32>
    %80 = arith.subf %68, %79 : vector<4x256xf32>
    %c240_i32 = arith.constant 240 : i32
    %81 = tpu.dynamic_rotate %2 by %c240_i32 dim 1 : vector<4x256xf32>, i32 -> vector<4x256xf32>
    %c1_33 = arith.constant 1 : index
    %c0_34 = arith.constant 0 : index
    %82 = vector.load %arg1[%c1_33, %c0_34] : memref<4x256xf32, #tpu.memory_space<vmem>>, vector<1x256xf32>
    %83 = arith.subf %2, %81 : vector<4x256xf32>
    %84 = vector.broadcast %82 : vector<1x256xf32> to vector<4x256xf32>
    %85 = arith.mulf %84, %83 : vector<4x256xf32>
    %86 = arith.addf %81, %85 : vector<4x256xf32>
    %c1_i32_35 = arith.constant 1 : i32
    %87 = tpu.dynamic_rotate %86 by %c1_i32_35 dim 1 : vector<4x256xf32>, i32 -> vector<4x256xf32>
    %c2_36 = arith.constant 2 : index
    %c0_37 = arith.constant 0 : index
    %88 = vector.load %arg1[%c2_36, %c0_37] : memref<4x256xf32, #tpu.memory_space<vmem>>, vector<1x256xf32>
    %89 = arith.subf %86, %87 : vector<4x256xf32>
    %90 = vector.broadcast %88 : vector<1x256xf32> to vector<4x256xf32>
    %91 = arith.mulf %90, %89 : vector<4x256xf32>
    %92 = arith.addf %87, %91 : vector<4x256xf32>
    %c0_38 = arith.constant 0 : index
    %c6 = arith.constant 6 : index
    %c0_39 = arith.constant 0 : index
    %93 = vector.load %arg3[%c0_38, %c6, %c0_39] : memref<2x9x256xbf16, #tpu.memory_space<vmem>>, vector<1x1x256xbf16>
    %94 = vector.shape_cast %93 : vector<1x1x256xbf16> to vector<1x256xbf16>
    %95 = arith.extf %94 : vector<1x256xbf16> to vector<1x256xf32>
    %96 = vector.broadcast %95 : vector<1x256xf32> to vector<4x256xf32>
    %97 = arith.mulf %96, %92 : vector<4x256xf32>
    %98 = arith.subf %80, %97 : vector<4x256xf32>
    %c240_i32_40 = arith.constant 240 : i32
    %99 = tpu.dynamic_rotate %2 by %c240_i32_40 dim 1 : vector<4x256xf32>, i32 -> vector<4x256xf32>
    %c1_41 = arith.constant 1 : index
    %c0_42 = arith.constant 0 : index
    %100 = vector.load %arg1[%c1_41, %c0_42] : memref<4x256xf32, #tpu.memory_space<vmem>>, vector<1x256xf32>
    %101 = arith.subf %2, %99 : vector<4x256xf32>
    %102 = vector.broadcast %100 : vector<1x256xf32> to vector<4x256xf32>
    %103 = arith.mulf %102, %101 : vector<4x256xf32>
    %104 = arith.addf %99, %103 : vector<4x256xf32>
    %c0_43 = arith.constant 0 : index
    %c7 = arith.constant 7 : index
    %c0_44 = arith.constant 0 : index
    %105 = vector.load %arg3[%c0_43, %c7, %c0_44] : memref<2x9x256xbf16, #tpu.memory_space<vmem>>, vector<1x1x256xbf16>
    %106 = vector.shape_cast %105 : vector<1x1x256xbf16> to vector<1x256xbf16>
    %107 = arith.extf %106 : vector<1x256xbf16> to vector<1x256xf32>
    %108 = vector.broadcast %107 : vector<1x256xf32> to vector<4x256xf32>
    %109 = arith.mulf %108, %104 : vector<4x256xf32>
    %110 = arith.subf %98, %109 : vector<4x256xf32>
    %c240_i32_45 = arith.constant 240 : i32
    %111 = tpu.dynamic_rotate %2 by %c240_i32_45 dim 1 : vector<4x256xf32>, i32 -> vector<4x256xf32>
    %c1_46 = arith.constant 1 : index
    %c0_47 = arith.constant 0 : index
    %112 = vector.load %arg1[%c1_46, %c0_47] : memref<4x256xf32, #tpu.memory_space<vmem>>, vector<1x256xf32>
    %113 = arith.subf %2, %111 : vector<4x256xf32>
    %114 = vector.broadcast %112 : vector<1x256xf32> to vector<4x256xf32>
    %115 = arith.mulf %114, %113 : vector<4x256xf32>
    %116 = arith.addf %111, %115 : vector<4x256xf32>
    %c255_i32_48 = arith.constant 255 : i32
    %117 = tpu.dynamic_rotate %116 by %c255_i32_48 dim 1 : vector<4x256xf32>, i32 -> vector<4x256xf32>
    %c3_49 = arith.constant 3 : index
    %c0_50 = arith.constant 0 : index
    %118 = vector.load %arg1[%c3_49, %c0_50] : memref<4x256xf32, #tpu.memory_space<vmem>>, vector<1x256xf32>
    %119 = arith.subf %116, %117 : vector<4x256xf32>
    %120 = vector.broadcast %118 : vector<1x256xf32> to vector<4x256xf32>
    %121 = arith.mulf %120, %119 : vector<4x256xf32>
    %122 = arith.addf %117, %121 : vector<4x256xf32>
    %c0_51 = arith.constant 0 : index
    %c8 = arith.constant 8 : index
    %c0_52 = arith.constant 0 : index
    %123 = vector.load %arg3[%c0_51, %c8, %c0_52] : memref<2x9x256xbf16, #tpu.memory_space<vmem>>, vector<1x1x256xbf16>
    %124 = vector.shape_cast %123 : vector<1x1x256xbf16> to vector<1x256xbf16>
    %125 = arith.extf %124 : vector<1x256xbf16> to vector<1x256xf32>
    %126 = vector.broadcast %125 : vector<1x256xf32> to vector<4x256xf32>
    %127 = arith.mulf %126, %122 : vector<4x256xf32>
    %128 = arith.subf %110, %127 : vector<4x256xf32>
    %c0_53 = arith.constant 0 : index
    %c0_54 = arith.constant 0 : index
    %c0_55 = arith.constant 0 : index
    %129 = vector.load %arg4[%c0_53, %c0_54, %c0_55] : memref<2x4x256xf32, #tpu.memory_space<vmem>>, vector<1x4x256xf32>
    %130 = vector.shape_cast %129 : vector<1x4x256xf32> to vector<4x256xf32>
    %131 = vector.shape_cast %128 : vector<4x256xf32> to vector<1x4x256xf32>
    tpu.vector_store %arg4[%c0_53, %c0_54, %c0_55], %131 {strides = array<i32>} : memref<2x4x256xf32, #tpu.memory_space<vmem>>, vector<1x4x256xf32>,
    %c1_56 = arith.constant 1 : index
    %c0_57 = arith.constant 0 : index
    %c0_58 = arith.constant 0 : index
    %132 = vector.load %arg2[%c1_56, %c0_57, %c0_58] : memref<2x4x256xbf16, #tpu.memory_space<vmem>>, vector<1x4x256xbf16>
    %133 = vector.shape_cast %132 : vector<1x4x256xbf16> to vector<4x256xbf16>
    %134 = arith.extf %133 : vector<4x256xbf16> to vector<4x256xf32>
    %c16_i32_59 = arith.constant 16 : i32
    %135 = tpu.dynamic_rotate %134 by %c16_i32_59 dim 1 : vector<4x256xf32>, i32 -> vector<4x256xf32>
    %c0_60 = arith.constant 0 : index
    %c0_61 = arith.constant 0 : index
    %136 = vector.load %arg1[%c0_60, %c0_61] : memref<4x256xf32, #tpu.memory_space<vmem>>, vector<1x256xf32>
    %137 = arith.subf %134, %135 : vector<4x256xf32>
    %138 = vector.broadcast %136 : vector<1x256xf32> to vector<4x256xf32>
    %139 = arith.mulf %138, %137 : vector<4x256xf32>
    %140 = arith.addf %135, %139 : vector<4x256xf32>
    %c1_i32_62 = arith.constant 1 : i32
    %141 = tpu.dynamic_rotate %140 by %c1_i32_62 dim 1 : vector<4x256xf32>, i32 -> vector<4x256xf32>
    %c2_63 = arith.constant 2 : index
    %c0_64 = arith.constant 0 : index
    %142 = vector.load %arg1[%c2_63, %c0_64] : memref<4x256xf32, #tpu.memory_space<vmem>>, vector<1x256xf32>
    %143 = arith.subf %140, %141 : vector<4x256xf32>
    %144 = vector.broadcast %142 : vector<1x256xf32> to vector<4x256xf32>
    %145 = arith.mulf %144, %143 : vector<4x256xf32>
    %146 = arith.addf %141, %145 : vector<4x256xf32>
    %c1_65 = arith.constant 1 : index
    %c0_66 = arith.constant 0 : index
    %c0_67 = arith.constant 0 : index
    %147 = vector.load %arg3[%c1_65, %c0_66, %c0_67] : memref<2x9x256xbf16, #tpu.memory_space<vmem>>, vector<1x1x256xbf16>
    %148 = vector.shape_cast %147 : vector<1x1x256xbf16> to vector<1x256xbf16>
    %149 = arith.extf %148 : vector<1x256xbf16> to vector<1x256xf32>
    %150 = vector.broadcast %149 : vector<1x256xf32> to vector<4x256xf32>
    %151 = arith.mulf %150, %146 : vector<4x256xf32>
    %152 = arith.subf %134, %151 : vector<4x256xf32>
    %c16_i32_68 = arith.constant 16 : i32
    %153 = tpu.dynamic_rotate %134 by %c16_i32_68 dim 1 : vector<4x256xf32>, i32 -> vector<4x256xf32>
    %c0_69 = arith.constant 0 : index
    %c0_70 = arith.constant 0 : index
    %154 = vector.load %arg1[%c0_69, %c0_70] : memref<4x256xf32, #tpu.memory_space<vmem>>, vector<1x256xf32>
    %155 = arith.subf %134, %153 : vector<4x256xf32>
    %156 = vector.broadcast %154 : vector<1x256xf32> to vector<4x256xf32>
    %157 = arith.mulf %156, %155 : vector<4x256xf32>
    %158 = arith.addf %153, %157 : vector<4x256xf32>
    %c1_71 = arith.constant 1 : index
    %c1_72 = arith.constant 1 : index
    %c0_73 = arith.constant 0 : index
    %159 = vector.load %arg3[%c1_71, %c1_72, %c0_73] : memref<2x9x256xbf16, #tpu.memory_space<vmem>>, vector<1x1x256xbf16>
    %160 = vector.shape_cast %159 : vector<1x1x256xbf16> to vector<1x256xbf16>
    %161 = arith.extf %160 : vector<1x256xbf16> to vector<1x256xf32>
    %162 = vector.broadcast %161 : vector<1x256xf32> to vector<4x256xf32>
    %163 = arith.mulf %162, %158 : vector<4x256xf32>
    %164 = arith.subf %152, %163 : vector<4x256xf32>
    %c16_i32_74 = arith.constant 16 : i32
    %165 = tpu.dynamic_rotate %134 by %c16_i32_74 dim 1 : vector<4x256xf32>, i32 -> vector<4x256xf32>
    %c0_75 = arith.constant 0 : index
    %c0_76 = arith.constant 0 : index
    %166 = vector.load %arg1[%c0_75, %c0_76] : memref<4x256xf32, #tpu.memory_space<vmem>>, vector<1x256xf32>
    %167 = arith.subf %134, %165 : vector<4x256xf32>
    %168 = vector.broadcast %166 : vector<1x256xf32> to vector<4x256xf32>
    %169 = arith.mulf %168, %167 : vector<4x256xf32>
    %170 = arith.addf %165, %169 : vector<4x256xf32>
    %c255_i32_77 = arith.constant 255 : i32
    %171 = tpu.dynamic_rotate %170 by %c255_i32_77 dim 1 : vector<4x256xf32>, i32 -> vector<4x256xf32>
    %c3_78 = arith.constant 3 : index
    %c0_79 = arith.constant 0 : index
    %172 = vector.load %arg1[%c3_78, %c0_79] : memref<4x256xf32, #tpu.memory_space<vmem>>, vector<1x256xf32>
    %173 = arith.subf %170, %171 : vector<4x256xf32>
    %174 = vector.broadcast %172 : vector<1x256xf32> to vector<4x256xf32>
    %175 = arith.mulf %174, %173 : vector<4x256xf32>
    %176 = arith.addf %171, %175 : vector<4x256xf32>
    %c1_80 = arith.constant 1 : index
    %c2_81 = arith.constant 2 : index
    %c0_82 = arith.constant 0 : index
    %177 = vector.load %arg3[%c1_80, %c2_81, %c0_82] : memref<2x9x256xbf16, #tpu.memory_space<vmem>>, vector<1x1x256xbf16>
    %178 = vector.shape_cast %177 : vector<1x1x256xbf16> to vector<1x256xbf16>
    %179 = arith.extf %178 : vector<1x256xbf16> to vector<1x256xf32>
    %180 = vector.broadcast %179 : vector<1x256xf32> to vector<4x256xf32>
    %181 = arith.mulf %180, %176 : vector<4x256xf32>
    %182 = arith.subf %164, %181 : vector<4x256xf32>
    %c1_i32_83 = arith.constant 1 : i32
    %183 = tpu.dynamic_rotate %134 by %c1_i32_83 dim 1 : vector<4x256xf32>, i32 -> vector<4x256xf32>
    %c2_84 = arith.constant 2 : index
    %c0_85 = arith.constant 0 : index
    %184 = vector.load %arg1[%c2_84, %c0_85] : memref<4x256xf32, #tpu.memory_space<vmem>>, vector<1x256xf32>
    %185 = arith.subf %134, %183 : vector<4x256xf32>
    %186 = vector.broadcast %184 : vector<1x256xf32> to vector<4x256xf32>
    %187 = arith.mulf %186, %185 : vector<4x256xf32>
    %188 = arith.addf %183, %187 : vector<4x256xf32>
    %c1_86 = arith.constant 1 : index
    %c3_87 = arith.constant 3 : index
    %c0_88 = arith.constant 0 : index
    %189 = vector.load %arg3[%c1_86, %c3_87, %c0_88] : memref<2x9x256xbf16, #tpu.memory_space<vmem>>, vector<1x1x256xbf16>
    %190 = vector.shape_cast %189 : vector<1x1x256xbf16> to vector<1x256xbf16>
    %191 = arith.extf %190 : vector<1x256xbf16> to vector<1x256xf32>
    %192 = vector.broadcast %191 : vector<1x256xf32> to vector<4x256xf32>
    %193 = arith.mulf %192, %188 : vector<4x256xf32>
    %194 = arith.subf %182, %193 : vector<4x256xf32>
    %c1_89 = arith.constant 1 : index
    %c4_90 = arith.constant 4 : index
    %c0_91 = arith.constant 0 : index
    %195 = vector.load %arg3[%c1_89, %c4_90, %c0_91] : memref<2x9x256xbf16, #tpu.memory_space<vmem>>, vector<1x1x256xbf16>
    %196 = vector.shape_cast %195 : vector<1x1x256xbf16> to vector<1x256xbf16>
    %197 = arith.extf %196 : vector<1x256xbf16> to vector<1x256xf32>
    %198 = vector.broadcast %197 : vector<1x256xf32> to vector<4x256xf32>
    %199 = arith.mulf %198, %134 : vector<4x256xf32>
    %200 = arith.subf %194, %199 : vector<4x256xf32>
    %c255_i32_92 = arith.constant 255 : i32
    %201 = tpu.dynamic_rotate %134 by %c255_i32_92 dim 1 : vector<4x256xf32>, i32 -> vector<4x256xf32>
    %c3_93 = arith.constant 3 : index
    %c0_94 = arith.constant 0 : index
    %202 = vector.load %arg1[%c3_93, %c0_94] : memref<4x256xf32, #tpu.memory_space<vmem>>, vector<1x256xf32>
    %203 = arith.subf %134, %201 : vector<4x256xf32>
    %204 = vector.broadcast %202 : vector<1x256xf32> to vector<4x256xf32>
    %205 = arith.mulf %204, %203 : vector<4x256xf32>
    %206 = arith.addf %201, %205 : vector<4x256xf32>
    %c1_95 = arith.constant 1 : index
    %c5_96 = arith.constant 5 : index
    %c0_97 = arith.constant 0 : index
    %207 = vector.load %arg3[%c1_95, %c5_96, %c0_97] : memref<2x9x256xbf16, #tpu.memory_space<vmem>>, vector<1x1x256xbf16>
    %208 = vector.shape_cast %207 : vector<1x1x256xbf16> to vector<1x256xbf16>
    %209 = arith.extf %208 : vector<1x256xbf16> to vector<1x256xf32>
    %210 = vector.broadcast %209 : vector<1x256xf32> to vector<4x256xf32>
    %211 = arith.mulf %210, %206 : vector<4x256xf32>
    %212 = arith.subf %200, %211 : vector<4x256xf32>
    %c240_i32_98 = arith.constant 240 : i32
    %213 = tpu.dynamic_rotate %134 by %c240_i32_98 dim 1 : vector<4x256xf32>, i32 -> vector<4x256xf32>
    %c1_99 = arith.constant 1 : index
    %c0_100 = arith.constant 0 : index
    %214 = vector.load %arg1[%c1_99, %c0_100] : memref<4x256xf32, #tpu.memory_space<vmem>>, vector<1x256xf32>
    %215 = arith.subf %134, %213 : vector<4x256xf32>
    %216 = vector.broadcast %214 : vector<1x256xf32> to vector<4x256xf32>
    %217 = arith.mulf %216, %215 : vector<4x256xf32>
    %218 = arith.addf %213, %217 : vector<4x256xf32>
    %c1_i32_101 = arith.constant 1 : i32
    %219 = tpu.dynamic_rotate %218 by %c1_i32_101 dim 1 : vector<4x256xf32>, i32 -> vector<4x256xf32>
    %c2_102 = arith.constant 2 : index
    %c0_103 = arith.constant 0 : index
    %220 = vector.load %arg1[%c2_102, %c0_103] : memref<4x256xf32, #tpu.memory_space<vmem>>, vector<1x256xf32>
    %221 = arith.subf %218, %219 : vector<4x256xf32>
    %222 = vector.broadcast %220 : vector<1x256xf32> to vector<4x256xf32>
    %223 = arith.mulf %222, %221 : vector<4x256xf32>
    %224 = arith.addf %219, %223 : vector<4x256xf32>
    %c1_104 = arith.constant 1 : index
    %c6_105 = arith.constant 6 : index
    %c0_106 = arith.constant 0 : index
    %225 = vector.load %arg3[%c1_104, %c6_105, %c0_106] : memref<2x9x256xbf16, #tpu.memory_space<vmem>>, vector<1x1x256xbf16>
    %226 = vector.shape_cast %225 : vector<1x1x256xbf16> to vector<1x256xbf16>
    %227 = arith.extf %226 : vector<1x256xbf16> to vector<1x256xf32>
    %228 = vector.broadcast %227 : vector<1x256xf32> to vector<4x256xf32>
    %229 = arith.mulf %228, %224 : vector<4x256xf32>
    %230 = arith.subf %212, %229 : vector<4x256xf32>
    %c240_i32_107 = arith.constant 240 : i32
    %231 = tpu.dynamic_rotate %134 by %c240_i32_107 dim 1 : vector<4x256xf32>, i32 -> vector<4x256xf32>
    %c1_108 = arith.constant 1 : index
    %c0_109 = arith.constant 0 : index
    %232 = vector.load %arg1[%c1_108, %c0_109] : memref<4x256xf32, #tpu.memory_space<vmem>>, vector<1x256xf32>
    %233 = arith.subf %134, %231 : vector<4x256xf32>
    %234 = vector.broadcast %232 : vector<1x256xf32> to vector<4x256xf32>
    %235 = arith.mulf %234, %233 : vector<4x256xf32>
    %236 = arith.addf %231, %235 : vector<4x256xf32>
    %c1_110 = arith.constant 1 : index
    %c7_111 = arith.constant 7 : index
    %c0_112 = arith.constant 0 : index
    %237 = vector.load %arg3[%c1_110, %c7_111, %c0_112] : memref<2x9x256xbf16, #tpu.memory_space<vmem>>, vector<1x1x256xbf16>
    %238 = vector.shape_cast %237 : vector<1x1x256xbf16> to vector<1x256xbf16>
    %239 = arith.extf %238 : vector<1x256xbf16> to vector<1x256xf32>
    %240 = vector.broadcast %239 : vector<1x256xf32> to vector<4x256xf32>
    %241 = arith.mulf %240, %236 : vector<4x256xf32>
    %242 = arith.subf %230, %241 : vector<4x256xf32>
    %c240_i32_113 = arith.constant 240 : i32
    %243 = tpu.dynamic_rotate %134 by %c240_i32_113 dim 1 : vector<4x256xf32>, i32 -> vector<4x256xf32>
    %c1_114 = arith.constant 1 : index
    %c0_115 = arith.constant 0 : index
    %244 = vector.load %arg1[%c1_114, %c0_115] : memref<4x256xf32, #tpu.memory_space<vmem>>, vector<1x256xf32>
    %245 = arith.subf %134, %243 : vector<4x256xf32>
    %246 = vector.broadcast %244 : vector<1x256xf32> to vector<4x256xf32>
    %247 = arith.mulf %246, %245 : vector<4x256xf32>
    %248 = arith.addf %243, %247 : vector<4x256xf32>
    %c255_i32_116 = arith.constant 255 : i32
    %249 = tpu.dynamic_rotate %248 by %c255_i32_116 dim 1 : vector<4x256xf32>, i32 -> vector<4x256xf32>
    %c3_117 = arith.constant 3 : index
    %c0_118 = arith.constant 0 : index
    %250 = vector.load %arg1[%c3_117, %c0_118] : memref<4x256xf32, #tpu.memory_space<vmem>>, vector<1x256xf32>
    %251 = arith.subf %248, %249 : vector<4x256xf32>
    %252 = vector.broadcast %250 : vector<1x256xf32> to vector<4x256xf32>
    %253 = arith.mulf %252, %251 : vector<4x256xf32>
    %254 = arith.addf %249, %253 : vector<4x256xf32>
    %c1_119 = arith.constant 1 : index
    %c8_120 = arith.constant 8 : index
    %c0_121 = arith.constant 0 : index
    %255 = vector.load %arg3[%c1_119, %c8_120, %c0_121] : memref<2x9x256xbf16, #tpu.memory_space<vmem>>, vector<1x1x256xbf16>
    %256 = vector.shape_cast %255 : vector<1x1x256xbf16> to vector<1x256xbf16>
    %257 = arith.extf %256 : vector<1x256xbf16> to vector<1x256xf32>
    %258 = vector.broadcast %257 : vector<1x256xf32> to vector<4x256xf32>
    %259 = arith.mulf %258, %254 : vector<4x256xf32>
    %260 = arith.subf %242, %259 : vector<4x256xf32>
    %c1_122 = arith.constant 1 : index
    %c0_123 = arith.constant 0 : index
    %c0_124 = arith.constant 0 : index
    %261 = vector.load %arg4[%c1_122, %c0_123, %c0_124] : memref<2x4x256xf32, #tpu.memory_space<vmem>>, vector<1x4x256xf32>
    %262 = vector.shape_cast %261 : vector<1x4x256xf32> to vector<4x256xf32>
    %263 = vector.shape_cast %260 : vector<4x256xf32> to vector<1x4x256xf32>
    tpu.vector_store %arg4[%c1_122, %c0_123, %c0_124], %263 {strides = array<i32>} : memref<2x4x256xf32, #tpu.memory_space<vmem>>, vector<1x4x256xf32>,
    return
  }
  func.func @transform_0(%arg0: i32) -> (i32, i32) {
    %c0_i32 = arith.constant 0 : i32
    %c0_i32_0 = arith.constant 0 : i32
    %c0_i32_1 = arith.constant 0 : i32
    return %c0_i32, %c0_i32_0 : i32, i32
  }
  func.func @transform_1(%arg0: i32) -> (i32, i32, i32) {
    %c0_i32 = arith.constant 0 : i32
    %c0_i32_0 = arith.constant 0 : i32
    %c0_i32_1 = arith.constant 0 : i32
    return %arg0, %c0_i32, %c0_i32_0 : i32, i32, i32
  }
  func.func @transform_2(%arg0: i32) -> (i32, i32, i32) {
    %c0_i32 = arith.constant 0 : i32
    %c0_i32_0 = arith.constant 0 : i32
    %c0_i32_1 = arith.constant 0 : i32
    return %arg0, %c0_i32, %c0_i32_0 : i32, i32, i32
  }
  func.func @transform_3(%arg0: i32) -> (i32, i32, i32) {
    %c0_i32 = arith.constant 0 : i32
    %c0_i32_0 = arith.constant 0 : i32
    %c0_i32_1 = arith.constant 0 : i32
    return %arg0, %c0_i32, %c0_i32_0 : i32, i32, i32
  }
}

</mosaic_0001>

<llo_original>
// kernel: tpu_custom_call.1
$region0: #{tpu_custom_call.1}
  #allocation0 [shape = 'u32[]', space=smem, size = 0x4, offset = 0x4, fixed_abs, tag = 'smem constant byte address 0x4 - core index']
  #allocation1 [shape = 'u32[144,128]{1,0:T(1,128)}', space=vmem, size = 0x12000, scoped, tag = 'internal scratch']
  %s0 = inlined_call_operand.vmem [shape: f32[4,256], index: 0, kind: input, shape index: {}]
  %s1 = inlined_call_operand.vmem [shape: bf16[4,4,256], index: 1, kind: input, shape index: {}]
  %s2 = inlined_call_operand.vmem [shape: bf16[4,9,256], index: 2, kind: input, shape index: {}]
  %s3 = inlined_call_operand.hbm [shape: f32[4,4,256], index: 3, kind: output, shape index: {}]
  %s4 = sld [smem:[#allocation0]]
  $region45: #{tpu_custom_call.1} parent=0
    _
  %s6 = ssub.s32 1, %s4
  %s7 = scalar_select 0, %s6, %s4
  $region1: #{tpu_custom_call.1} parent=0
    #allocation2 [shape = 'u8[16384]{0}', space=vmem, size = 0x4000, scoped, tag = 'output window, operand 0']
    #allocation3 [shape = 's32[2]{0}', space=sflag, size = 0x8, scoped, tag = 'scoped memory for tpu_custom_call.1']
    %8 = vsyncpa [#allocation3], 0
    %s9 = scalar_lea.sflag [#allocation3], 1
    %10 = vsyncpa %s9, 0
    loop: start=0, step=1, limit=4
    $region2: #{tpu_custom_call.1} parent=1 // loop_pre_header
      _
    $region3: #{tpu_custom_call.1} parent=1 // loop_header
      %s12 = sphi 0, %s16
      %p13 = scmp.ge.s32.totalorder %s12, 4
      %s20 = sphi 0, %s20
      %s22 = sphi 0, %s20
      %s23 = sphi 0, %s22
      %s37 = sphi 0, %s23
      %s43 = sphi 0, %s45
      %s46 = sphi 0, %s43
      %s47 = sphi 0, %s46
      %s63 = sphi 0, %s47
      %s69 = sphi 0, %s71
      %s72 = sphi 0, %s69
      %s73 = sphi 0, %s72
      %s89 = sphi 0, %s73
      %s95 = sphi 0, %s97
      %s98 = sphi 0, %s95
      %s99 = sphi 0, %s98
      %s115 = sphi 0, %s99
    $region4: #{tpu_custom_call.1} parent=1 // loop_header_branch
      %15 = sbr.rel (%p13) target = $region8
    $region5: #{tpu_custom_call.1} parent=1 // loop_body
      %s17 = ssub.s32 %s12, 1
      %s18 = ssub.s32 %s12, 2
      %s19 = sadd.s32 %s12, 1
      %s21 = sadd.s32 %s20, 1
      %p24 = scmp.eq.s32.totalorder %s12, 1
      %p25 = scmp.ne.s32.totalorder %s20, %s22
      %p26 = scmp.eq.s32.totalorder %s12, 0
      %p27 = por %p25, %p26
      %p28 = scmp.ne.s32.totalorder %s20, %s22
      %p29 = scmp.eq.s32.totalorder %s17, 1
      %p30 = por %p28, %p29
      %p31 = scmp.ne.s32.totalorder %s22, %s23
      %p32 = scmp.eq.s32.totalorder %s17, 0
      %p33 = por %p31, %p32
      %p34 = scmp.ne.s32.totalorder %s22, %s23
      %p35 = scmp.eq.s32.totalorder %s18, 1
      %p36 = por %p34, %p35
      %p38 = scmp.ne.s32.totalorder %s23, %s37
      %p39 = scmp.eq.s32.totalorder %s18, 0
      %p40 = por %p38, %p39
      %s41 = ssub.s32 %s12, %s19
      %p42 = scmp.eq.s32.totalorder %s41, 0
      %s44 = sadd.s32 %s43, 1
      %s45 = scalar_select %p42, %s43, %s44
      %p48 = pneg %p42
      %p49 = scmp.eq.s32.totalorder %s12, 1
      %p50 = por %p48, %p49
      %p51 = scmp.ne.s32.totalorder %s43, %s46
      %p52 = scmp.eq.s32.totalorder %s12, 0
      %p53 = por %p51, %p52
      %p54 = scmp.ne.s32.totalorder %s43, %s46
      %p55 = scmp.eq.s32.totalorder %s17, 1
      %p56 = por %p54, %p55
      %p57 = scmp.ne.s32.totalorder %s46, %s47
      %p58 = scmp.eq.s32.totalorder %s17, 0
      %p59 = por %p57, %p58
      %p60 = scmp.ne.s32.totalorder %s46, %s47
      %p61 = scmp.eq.s32.totalorder %s18, 1
      %p62 = por %p60, %p61
      %p64 = scmp.ne.s32.totalorder %s47, %s63
      %p65 = scmp.eq.s32.totalorder %s18, 0
      %p66 = por %p64, %p65
      %s67 = ssub.s32 %s12, %s19
      %p68 = scmp.eq.s32.totalorder %s67, 0
      %s70 = sadd.s32 %s69, 1
      %s71 = scalar_select %p68, %s69, %s70
      %p74 = pneg %p68
      %p75 = scmp.eq.s32.totalorder %s12, 1
      %p76 = por %p74, %p75
      %p77 = scmp.ne.s32.totalorder %s69, %s72
      %p78 = scmp.eq.s32.totalorder %s12, 0
      %p79 = por %p77, %p78
      %p80 = scmp.ne.s32.totalorder %s69, %s72
      %p81 = scmp.eq.s32.totalorder %s17, 1
      %p82 = por %p80, %p81
      %p83 = scmp.ne.s32.totalorder %s72, %s73
      %p84 = scmp.eq.s32.totalorder %s17, 0
      %p85 = por %p83, %p84
      %p86 = scmp.ne.s32.totalorder %s72, %s73
      %p87 = scmp.eq.s32.totalorder %s18, 1
      %p88 = por %p86, %p87
      %p90 = scmp.ne.s32.totalorder %s73, %s89
      %p91 = scmp.eq.s32.totalorder %s18, 0
      %p92 = por %p90, %p91
      %s93 = ssub.s32 %s12, %s19
      %p94 = scmp.eq.s32.totalorder %s93, 0
      %s96 = sadd.s32 %s95, 1
      %s97 = scalar_select %p94, %s95, %s96
      %p100 = pneg %p94
      %p101 = scmp.eq.s32.totalorder %s12, 1
      %p102 = por %p100, %p101
      %p103 = scmp.ne.s32.totalorder %s95, %s98
      %p104 = scmp.eq.s32.totalorder %s12, 0
      %p105 = por %p103, %p104
      %p106 = scmp.ne.s32.totalorder %s95, %s98
      %p107 = scmp.eq.s32.totalorder %s17, 1
      %p108 = por %p106, %p107
      %p109 = scmp.ne.s32.totalorder %s98, %s99
      %p110 = scmp.eq.s32.totalorder %s17, 0
      %p111 = por %p109, %p110
      %p112 = scmp.ne.s32.totalorder %s98, %s99
      %p113 = scmp.eq.s32.totalorder %s18, 1
      %p114 = por %p112, %p113
      %p116 = scmp.ne.s32.totalorder %s99, %s115
      %p117 = scmp.eq.s32.totalorder %s18, 0
      %p118 = por %p116, %p117
      %p119 = scmp.le.s32.totalorder 1, %s12
      %p120 = scmp.lt.s32.totalorder %s12, 3
      %p121 = pnand %p119, %p120
      %p122 = pneg %p121
      // Predicated region
      $region9: #{tpu_custom_call.1} parent=5 // pred_check
        _
      $region10: #{tpu_custom_call.1} parent=5 // pred_check_branch
        %124 = sbr.rel (%p121) target = $region12
      $region11: #{tpu_custom_call.1} parent=5 // pred_region
        %s125 = ssub.s32 %s12, 1
        // Predicated region
        $region13: #{tpu_custom_call.1} parent=11 // pred_check
          %p126 = pneg %p33
        $region14: #{tpu_custom_call.1} parent=11 // pred_check_branch
          %128 = sbr.rel (%p126) target = $region16
        $region15: #{tpu_custom_call.1} parent=11 // pred_region
          _
        $region16: #{tpu_custom_call.1} parent=11 // pred_fallthru
          _
      $region12: #{tpu_custom_call.1} parent=5 // pred_fallthru
        _
      %p129 = scmp.lt.s32.totalorder %s12, 2
      // Predicated region
      $region17: #{tpu_custom_call.1} parent=5 // pred_check
        %p130 = pneg %p129
      $region18: #{tpu_custom_call.1} parent=5 // pred_check_branch
        %132 = sbr.rel (%p130) target = $region20
      $region19: #{tpu_custom_call.1} parent=5 // pred_region
        // Predicated region
        $region21: #{tpu_custom_call.1} parent=19 // pred_check
          %p133 = pneg %p53
        $region22: #{tpu_custom_call.1} parent=19 // pred_check_branch
          %135 = sbr.rel (%p133) target = $region24
        $region23: #{tpu_custom_call.1} parent=19 // pred_region
          %s136 = smul.u32 2, %s12
          %p137 = scmp.lt.s32.totalorder %s136, 3
          %s138 = scalar_select %p137, %s136, 3
          %s139 = smul.addr %s138, 2
          %s140 = smul.addr %s139, 2
          %s141 = scalar_lea.vmem %s1, %s140
          %s142 = smul.u32 2, %s12
        $region24: #{tpu_custom_call.1} parent=19 // pred_fallthru
          _
        // Predicated region
        $region25: #{tpu_custom_call.1} parent=19 // pred_check
          %p143 = pneg %p79
        $region26: #{tpu_custom_call.1} parent=19 // pred_check_branch
          %145 = sbr.rel (%p143) target = $region28
        $region27: #{tpu_custom_call.1} parent=19 // pred_region
          %s146 = smul.u32 2, %s12
          %p147 = scmp.lt.s32.totalorder %s146, 3
          %s148 = scalar_select %p147, %s146, 3
          %s149 = smul.addr %s148, 4
          %s150 = smul.addr %s149, 4
          %s151 = scalar_lea.vmem %s2, %s150
          %s152 = smul.u32 2, %s12
        $region28: #{tpu_custom_call.1} parent=19 // pred_fallthru
          _
      $region20: #{tpu_custom_call.1} parent=5 // pred_fallthru
        _
      %p153 = scmp.le.s32.totalorder 1, %s12
      %p154 = scmp.lt.s32.totalorder %s12, 3
      %p155 = pnand %p153, %p154
      %p156 = pneg %p155
      // Predicated region
      $region29: #{tpu_custom_call.1} parent=5 // pred_check
        _
      $region30: #{tpu_custom_call.1} parent=5 // pred_check_branch
        %158 = sbr.rel (%p155) target = $region32
      $region31: #{tpu_custom_call.1} parent=5 // pred_region
        %s159 = ssub.s32 %s12, 1
        %p160 = pneg %p33
        %p161 = pneg %p30
        %s162 = smul.u32 2, %s17
        %p163 = scmp.lt.s32.totalorder %s162, 3
        %s164 = scalar_select %p163, %s162, 3
        %s165 = smul.addr %s164, 2
        %s166 = smul.addr %s165, 2
        %s167 = scalar_lea.vmem %s1, %s166
        %p168 = pneg %p59
        %p169 = pneg %p56
        %s170 = smul.u32 2, %s17
        %p171 = scmp.lt.s32.totalorder %s170, 3
        %s172 = scalar_select %p171, %s170, 3
        %s173 = smul.addr %s172, 4
        %s174 = smul.addr %s173, 4
        %s175 = scalar_lea.vmem %s2, %s174
        %p176 = pneg %p85
        %p177 = pneg %p82
        %p178 = pneg %p111
        %p179 = pneg %p108
        %s180 = sand.u32 %s98, 1
        %s181 = scalar_lea.sflag [#allocation3], %s180
        %s182 = sand.u32 %s98, 1
        %s183 = smul.addr %s182, 16
        %s184 = scalar_lea.vmem [#allocation2], %s183
        %s185 = smul.u32 2, %s17
        %p186 = scmp.lt.s32.totalorder %s185, 3
        %s187 = scalar_select %p186, %s185, 3
        %s188 = smul.addr %s187, 2
        %s189 = smul.addr %s188, 2
        %s190 = scalar_lea.vmem %s1, %s189
        %s191 = smul.u32 2, %s17
        %s192 = smul.u32 2, %s17
        %p193 = scmp.lt.s32.totalorder %s192, 3
        %s194 = scalar_select %p193, %s192, 3
        %s195 = smul.addr %s194, 4
        %s196 = smul.addr %s195, 4
        %s197 = scalar_lea.vmem %s2, %s196
        %s198 = smul.u32 2, %s17
        %s199 = smul.u32 2, %s17
        %v200 = vld [vmem:[%s190] sm:$0xf]
        %v201 = vunpack.c.l.bf16 %v200
        %v203 = vcombine.high %v201, %v201
        %205 = vrot.lane.b32.xlu0 %v201, 16
        %v206 = vpop.permute.xlu0 %205
        %207 = vrot.lane.b32.xlu0 %v203, 16
        %v208 = vpop.permute.xlu0 %207
        %v209 = vlaneseq
        %v210 = vand.u32 %v209, 127
        %vm211 = vcmp.lt.s32.totalorder %v210, 16
        %v212 = vsel %vm211, %v206, %v208
        %v213 = vsel %vm211, %v208, %v206
        %v214 = vld [vmem:[%s0] ss:$4 sm:$0x3]
        %v217 = vcombine.low %v213, %v212
        %v219 = vsub.f32 %v201, %v217
        %v221 = vlaneseq
        %v222 = vshrl.u32 %v221, 7
        %v223 = vsub.s32 0, %v222
        %v224 = vrot.slane %v214, %v223
        %v225 = vlaneseq
        %v226 = vshrl.u32 %v225, 7
        %v227 = vsub.s32 1, %v226
        %v228 = vrot.slane %v214, %v227
        %v232 = vcombine.high %v219, %v219
        %v234 = vmul.f32 %v224, %v219
        %v235 = vmul.f32 %v228, %v232
        %v236 = vadd.f32 %v213, %v234
        %v237 = vadd.f32 %v212, %v235
        %238 = vrot.lane.b32.xlu0 %v236, 1
        %v239 = vpop.permute.xlu0 %238
        %240 = vrot.lane.b32.xlu0 %v237, 1
        %v241 = vpop.permute.xlu0 %240
        %vm242 = vcmp.lt.s32.totalorder %v210, 1
        %v243 = vsel %vm242, %v239, %v241
        %v244 = vsel %vm242, %v241, %v239
        %s245 = scalar_lea.vmem %s0, 2
        %v246 = vld [vmem:[%s245] ss:$4 sm:$0x3]
        %v247 = vsub.f32 %v236, %v244
        %v248 = vsub.f32 %v237, %v243
        %v250 = vlaneseq
        %v251 = vshrl.u32 %v250, 7
        %v252 = vsub.s32 0, %v251
        %v253 = vrot.slane %v246, %v252
        %v254 = vlaneseq
        %v255 = vshrl.u32 %v254, 7
        %v256 = vsub.s32 1, %v255
        %v257 = vrot.slane %v246, %v256
        %v260 = vmul.f32 %v253, %v247
        %v261 = vmul.f32 %v257, %v248
        %v262 = vadd.f32 %v244, %v260
        %v263 = vadd.f32 %v243, %v261
        %v264 = vld [vmem:[%s197] sm:$0x11]
        %v265 = vunpack.c.l.bf16 %v264
        %v266 = vunpack.c.h.bf16 %v264
        %v267 = vlaneseq
        %v268 = vshrl.u32 %v267, 7
        %v269 = vsub.s32 0, %v268
        %v270 = vrot.slane %v265, %v269
        %v271 = vlaneseq
        %v272 = vshrl.u32 %v271, 7
        %v273 = vsub.s32 0, %v272
        %v274 = vrot.slane %v266, %v273
        %v275 = vmul.f32 %v270, %v262
        %v276 = vmul.f32 %v274, %v263
        %v279 = vcombine.low %v275, %v276
        %v281 = vsub.f32 %v201, %v279
        %v282 = vlaneseq
        %v283 = vshrl.u32 %v282, 7
        %v284 = vsub.s32 1, %v283
        %v285 = vrot.slane %v265, %v284
        %v286 = vlaneseq
        %v287 = vshrl.u32 %v286, 7
        %v288 = vsub.s32 1, %v287
        %v289 = vrot.slane %v266, %v288
        %v290 = vmul.f32 %v285, %v236
        %v291 = vmul.f32 %v289, %v237
        %v294 = vcombine.low %v290, %v291
        %v296 = vsub.f32 %v281, %v294
        %297 = vrot.lane.b32.xlu0 %v236, 127
        %v298 = vpop.permute.xlu0 %297
        %299 = vrot.lane.b32.xlu0 %v237, 127
        %v300 = vpop.permute.xlu0 %299
        %vm301 = vcmp.lt.s32.totalorder %v210, 127
        %v302 = vsel %vm301, %v298, %v300
        %v303 = vsel %vm301, %v300, %v298
        %s304 = scalar_lea.vmem %s0, 3
        %v305 = vld [vmem:[%s304] ss:$4 sm:$0x3]
        %v306 = vsub.f32 %v236, %v302
        %v307 = vsub.f32 %v237, %v303
        %v309 = vlaneseq
        %v310 = vshrl.u32 %v309, 7
        %v311 = vsub.s32 0, %v310
        %v312 = vrot.slane %v305, %v311
        %v313 = vlaneseq
        %v314 = vshrl.u32 %v313, 7
        %v315 = vsub.s32 1, %v314
        %v316 = vrot.slane %v305, %v315
        %v319 = vmul.f32 %v312, %v306
        %v320 = vmul.f32 %v316, %v307
        %v321 = vadd.f32 %v302, %v319
        %v322 = vadd.f32 %v303, %v320
        %v323 = vld [vmem:[%s197] sm:$0x22]
        %v324 = vunpack.c.l.bf16 %v323
        %v325 = vunpack.c.h.bf16 %v323
        %v326 = vlaneseq
        %v327 = vshrl.u32 %v326, 7
        %v328 = vsub.s32 2, %v327
        %v329 = vrot.slane %v324, %v328
        %v330 = vlaneseq
        %v331 = vshrl.u32 %v330, 7
        %v332 = vsub.s32 2, %v331
        %v333 = vrot.slane %v325, %v332
        %v334 = vmul.f32 %v329, %v321
        %v335 = vmul.f32 %v333, %v322
        %v338 = vcombine.low %v334, %v335
        %v340 = vsub.f32 %v296, %v338
        %341 = vrot.lane.b32.xlu0 %v201, 1
        %v342 = vpop.permute.xlu0 %341
        %343 = vrot.lane.b32.xlu0 %v203, 1
        %v344 = vpop.permute.xlu0 %343
        %v345 = vsel %vm242, %v342, %v344
        %v346 = vsel %vm242, %v344, %v342
        %v349 = vcombine.low %v346, %v345
        %v351 = vsub.f32 %v201, %v349
        %v353 = vcombine.high %v351, %v351
        %v355 = vmul.f32 %v253, %v351
        %v356 = vmul.f32 %v257, %v353
        %v357 = vadd.f32 %v346, %v355
        %v358 = vadd.f32 %v345, %v356
        %v359 = vlaneseq
        %v360 = vshrl.u32 %v359, 7
        %v361 = vsub.s32 3, %v360
        %v362 = vrot.slane %v324, %v361
        %v363 = vlaneseq
        %v364 = vshrl.u32 %v363, 7
        %v365 = vsub.s32 3, %v364
        %v366 = vrot.slane %v325, %v365
        %v367 = vmul.f32 %v362, %v357
        %v368 = vmul.f32 %v366, %v358
        %v371 = vcombine.low %v367, %v368
        %v373 = vsub.f32 %v340, %v371
        %v374 = vld [vmem:[%s197] sm:$0x44]
        %v375 = vunpack.c.l.bf16 %v374
        %v376 = vunpack.c.h.bf16 %v374
        %v377 = vlaneseq
        %v378 = vshrl.u32 %v377, 7
        %v379 = vsub.s32 4, %v378
        %v380 = vrot.slane %v375, %v379
        %v381 = vlaneseq
        %v382 = vshrl.u32 %v381, 7
        %v383 = vsub.s32 4, %v382
        %v384 = vrot.slane %v376, %v383
        %v385 = vmul.f32 %v380, %v201
        %v386 = vmul.f32 %v384, %v203
        %v389 = vcombine.low %v385, %v386
        %v391 = vsub.f32 %v373, %v389
        %392 = vrot.lane.b32.xlu0 %v201, 127
        %v393 = vpop.permute.xlu0 %392
        %394 = vrot.lane.b32.xlu0 %v203, 127
        %v395 = vpop.permute.xlu0 %394
        %v396 = vsel %vm301, %v393, %v395
        %v397 = vsel %vm301, %v395, %v393
        %v400 = vcombine.low %v396, %v397
        %v402 = vsub.f32 %v201, %v400
        %v404 = vcombine.high %v402, %v402
        %v406 = vmul.f32 %v312, %v402
        %v407 = vmul.f32 %v316, %v404
        %v408 = vadd.f32 %v396, %v406
        %v409 = vadd.f32 %v397, %v407
        %v410 = vlaneseq
        %v411 = vshrl.u32 %v410, 7
        %v412 = vsub.s32 5, %v411
        %v413 = vrot.slane %v375, %v412
        %v414 = vlaneseq
        %v415 = vshrl.u32 %v414, 7
        %v416 = vsub.s32 5, %v415
        %v417 = vrot.slane %v376, %v416
        %v418 = vmul.f32 %v413, %v408
        %v419 = vmul.f32 %v417, %v409
        %v422 = vcombine.low %v418, %v419
        %v424 = vsub.f32 %v391, %v422
        %425 = vrot.lane.b32.xlu0 %v201, 112
        %v426 = vpop.permute.xlu0 %425
        %427 = vrot.lane.b32.xlu0 %v203, 112
        %v428 = vpop.permute.xlu0 %427
        %vm429 = vcmp.lt.s32.totalorder %v210, 112
        %v430 = vsel %vm429, %v426, %v428
        %v431 = vsel %vm429, %v428, %v426
        %s432 = scalar_lea.vmem %s0, 1
        %v433 = vld [vmem:[%s432] ss:$4 sm:$0x3]
        %v436 = vcombine.low %v430, %v431
        %v438 = vsub.f32 %v201, %v436
        %v440 = vlaneseq
        %v441 = vshrl.u32 %v440, 7
        %v442 = vsub.s32 0, %v441
        %v443 = vrot.slane %v433, %v442
        %v444 = vlaneseq
        %v445 = vshrl.u32 %v444, 7
        %v446 = vsub.s32 1, %v445
        %v447 = vrot.slane %v433, %v446
        %v451 = vcombine.high %v438, %v438
        %v453 = vmul.f32 %v443, %v438
        %v454 = vmul.f32 %v447, %v451
        %v455 = vadd.f32 %v430, %v453
        %v456 = vadd.f32 %v431, %v454
        %457 = vrot.lane.b32.xlu0 %v455, 1
        %v458 = vpop.permute.xlu0 %457
        %459 = vrot.lane.b32.xlu0 %v456, 1
        %v460 = vpop.permute.xlu0 %459
        %v461 = vsel %vm242, %v458, %v460
        %v462 = vsel %vm242, %v460, %v458
        %v463 = vsub.f32 %v455, %v462
        %v464 = vsub.f32 %v456, %v461
        %v465 = vmul.f32 %v253, %v463
        %v466 = vmul.f32 %v257, %v464
        %v467 = vadd.f32 %v462, %v465
        %v468 = vadd.f32 %v461, %v466
        %v469 = vld [vmem:[%s197] sm:$0x88]
        %v470 = vunpack.c.l.bf16 %v469
        %v471 = vunpack.c.h.bf16 %v469
        %v472 = vlaneseq
        %v473 = vshrl.u32 %v472, 7
        %v474 = vsub.s32 6, %v473
        %v475 = vrot.slane %v470, %v474
        %v476 = vlaneseq
        %v477 = vshrl.u32 %v476, 7
        %v478 = vsub.s32 6, %v477
        %v479 = vrot.slane %v471, %v478
        %v480 = vmul.f32 %v475, %v467
        %v481 = vmul.f32 %v479, %v468
        %v484 = vcombine.low %v480, %v481
        %v486 = vsub.f32 %v424, %v484
        %v487 = vlaneseq
        %v488 = vshrl.u32 %v487, 7
        %v489 = vsub.s32 7, %v488
        %v490 = vrot.slane %v470, %v489
        %v491 = vlaneseq
        %v492 = vshrl.u32 %v491, 7
        %v493 = vsub.s32 7, %v492
        %v494 = vrot.slane %v471, %v493
        %v495 = vmul.f32 %v490, %v455
        %v496 = vmul.f32 %v494, %v456
        %v499 = vcombine.low %v495, %v496
        %v501 = vsub.f32 %v486, %v499
        %502 = vrot.lane.b32.xlu0 %v455, 127
        %v503 = vpop.permute.xlu0 %502
        %504 = vrot.lane.b32.xlu0 %v456, 127
        %v505 = vpop.permute.xlu0 %504
        %v506 = vsel %vm301, %v503, %v505
        %v507 = vsel %vm301, %v505, %v503
        %v508 = vsub.f32 %v455, %v506
        %v509 = vsub.f32 %v456, %v507
        %v510 = vmul.f32 %v312, %v508
        %v511 = vmul.f32 %v316, %v509
        %v512 = vadd.f32 %v506, %v510
        %v513 = vadd.f32 %v507, %v511
        %v514 = vld [vmem:[%s197 + $0x8] sm:$0x11]
        %v515 = vunpack.c.l.bf16 %v514
        %v516 = vunpack.c.h.bf16 %v514
        %v517 = vlaneseq
        %v518 = vshrl.u32 %v517, 7
        %v519 = vsub.s32 0, %v518
        %v520 = vrot.slane %v515, %v519
        %v521 = vlaneseq
        %v522 = vshrl.u32 %v521, 7
        %v523 = vsub.s32 0, %v522
        %v524 = vrot.slane %v516, %v523
        %v525 = vmul.f32 %v520, %v512
        %v526 = vmul.f32 %v524, %v513
        %v529 = vcombine.low %v525, %v526
        %v531 = vsub.f32 %v501, %v529
        %532 = vst [vmem:[%s184] sm:$0xff] %v531
        %s533 = scalar_lea.vmem %s190, 4
        %v534 = vld [vmem:[%s533] sm:$0xf]
        %v535 = vunpack.c.l.bf16 %v534
        %v537 = vcombine.high %v535, %v535
        %539 = vrot.lane.b32.xlu0 %v535, 16
        %v540 = vpop.permute.xlu0 %539
        %541 = vrot.lane.b32.xlu0 %v537, 16
        %v542 = vpop.permute.xlu0 %541
        %v543 = vsel %vm211, %v540, %v542
        %v544 = vsel %vm211, %v542, %v540
        %v545 = vld [vmem:[%s0] ss:$4 sm:$0x3]
        %v548 = vcombine.low %v544, %v543
        %v550 = vsub.f32 %v535, %v548
        %v552 = vlaneseq
        %v553 = vshrl.u32 %v552, 7
        %v554 = vsub.s32 0, %v553
        %v555 = vrot.slane %v545, %v554
        %v556 = vlaneseq
        %v557 = vshrl.u32 %v556, 7
        %v558 = vsub.s32 1, %v557
        %v559 = vrot.slane %v545, %v558
        %v563 = vcombine.high %v550, %v550
        %v565 = vmul.f32 %v555, %v550
        %v566 = vmul.f32 %v559, %v563
        %v567 = vadd.f32 %v544, %v565
        %v568 = vadd.f32 %v543, %v566
        %569 = vrot.lane.b32.xlu0 %v567, 1
        %v570 = vpop.permute.xlu0 %569
        %571 = vrot.lane.b32.xlu0 %v568, 1
        %v572 = vpop.permute.xlu0 %571
        %v573 = vsel %vm242, %v570, %v572
        %v574 = vsel %vm242, %v572, %v570
        %v575 = vld [vmem:[%s245] ss:$4 sm:$0x3]
        %v576 = vsub.f32 %v567, %v574
        %v577 = vsub.f32 %v568, %v573
        %v579 = vlaneseq
        %v580 = vshrl.u32 %v579, 7
        %v581 = vsub.s32 0, %v580
        %v582 = vrot.slane %v575, %v581
        %v583 = vlaneseq
        %v584 = vshrl.u32 %v583, 7
        %v585 = vsub.s32 1, %v584
        %v586 = vrot.slane %v575, %v585
        %v589 = vmul.f32 %v582, %v576
        %v590 = vmul.f32 %v586, %v577
        %v591 = vadd.f32 %v574, %v589
        %v592 = vadd.f32 %v573, %v590
        %s593 = scalar_lea.vmem %s197, 16
        %v594 = vld [vmem:[%s593] sm:$0x11]
        %v595 = vunpack.c.l.bf16 %v594
        %v596 = vunpack.c.h.bf16 %v594
        %v597 = vlaneseq
        %v598 = vshrl.u32 %v597, 7
        %v599 = vsub.s32 0, %v598
        %v600 = vrot.slane %v595, %v599
        %v601 = vlaneseq
        %v602 = vshrl.u32 %v601, 7
        %v603 = vsub.s32 0, %v602
        %v604 = vrot.slane %v596, %v603
        %v605 = vmul.f32 %v600, %v591
        %v606 = vmul.f32 %v604, %v592
        %v609 = vcombine.low %v605, %v606
        %v611 = vsub.f32 %v535, %v609
        %v612 = vlaneseq
        %v613 = vshrl.u32 %v612, 7
        %v614 = vsub.s32 1, %v613
        %v615 = vrot.slane %v595, %v614
        %v616 = vlaneseq
        %v617 = vshrl.u32 %v616, 7
        %v618 = vsub.s32 1, %v617
        %v619 = vrot.slane %v596, %v618
        %v620 = vmul.f32 %v615, %v567
        %v621 = vmul.f32 %v619, %v568
        %v624 = vcombine.low %v620, %v621
        %v626 = vsub.f32 %v611, %v624
        %627 = vrot.lane.b32.xlu0 %v567, 127
        %v628 = vpop.permute.xlu0 %627
        %629 = vrot.lane.b32.xlu0 %v568, 127
        %v630 = vpop.permute.xlu0 %629
        %v631 = vsel %vm301, %v628, %v630
        %v632 = vsel %vm301, %v630, %v628
        %v633 = vld [vmem:[%s304] ss:$4 sm:$0x3]
        %v634 = vsub.f32 %v567, %v631
        %v635 = vsub.f32 %v568, %v632
        %v637 = vlaneseq
        %v638 = vshrl.u32 %v637, 7
        %v639 = vsub.s32 0, %v638
        %v640 = vrot.slane %v633, %v639
        %v641 = vlaneseq
        %v642 = vshrl.u32 %v641, 7
        %v643 = vsub.s32 1, %v642
        %v644 = vrot.slane %v633, %v643
        %v647 = vmul.f32 %v640, %v634
        %v648 = vmul.f32 %v644, %v635
        %v649 = vadd.f32 %v631, %v647
        %v650 = vadd.f32 %v632, %v648
        %v651 = vld [vmem:[%s593] sm:$0x22]
        %v652 = vunpack.c.l.bf16 %v651
        %v653 = vunpack.c.h.bf16 %v651
        %v654 = vlaneseq
        %v655 = vshrl.u32 %v654, 7
        %v656 = vsub.s32 2, %v655
        %v657 = vrot.slane %v652, %v656
        %v658 = vlaneseq
        %v659 = vshrl.u32 %v658, 7
        %v660 = vsub.s32 2, %v659
        %v661 = vrot.slane %v653, %v660
        %v662 = vmul.f32 %v657, %v649
        %v663 = vmul.f32 %v661, %v650
        %v666 = vcombine.low %v662, %v663
        %v668 = vsub.f32 %v626, %v666
        %669 = vrot.lane.b32.xlu0 %v535, 1
        %v670 = vpop.permute.xlu0 %669
        %671 = vrot.lane.b32.xlu0 %v537, 1
        %v672 = vpop.permute.xlu0 %671
        %v673 = vsel %vm242, %v670, %v672
        %v674 = vsel %vm242, %v672, %v670
        %v677 = vcombine.low %v674, %v673
        %v679 = vsub.f32 %v535, %v677
        %v681 = vcombine.high %v679, %v679
        %v683 = vmul.f32 %v582, %v679
        %v684 = vmul.f32 %v586, %v681
        %v685 = vadd.f32 %v674, %v683
        %v686 = vadd.f32 %v673, %v684
        %v687 = vlaneseq
        %v688 = vshrl.u32 %v687, 7
        %v689 = vsub.s32 3, %v688
        %v690 = vrot.slane %v652, %v689
        %v691 = vlaneseq
        %v692 = vshrl.u32 %v691, 7
        %v693 = vsub.s32 3, %v692
        %v694 = vrot.slane %v653, %v693
        %v695 = vmul.f32 %v690, %v685
        %v696 = vmul.f32 %v694, %v686
        %v699 = vcombine.low %v695, %v696
        %v701 = vsub.f32 %v668, %v699
        %v702 = vld [vmem:[%s593] sm:$0x44]
        %v703 = vunpack.c.l.bf16 %v702
        %v704 = vunpack.c.h.bf16 %v702
        %v705 = vlaneseq
        %v706 = vshrl.u32 %v705, 7
        %v707 = vsub.s32 4, %v706
        %v708 = vrot.slane %v703, %v707
        %v709 = vlaneseq
        %v710 = vshrl.u32 %v709, 7
        %v711 = vsub.s32 4, %v710
        %v712 = vrot.slane %v704, %v711
        %v713 = vmul.f32 %v708, %v535
        %v714 = vmul.f32 %v712, %v537
        %v717 = vcombine.low %v713, %v714
        %v719 = vsub.f32 %v701, %v717
        %720 = vrot.lane.b32.xlu0 %v535, 127
        %v721 = vpop.permute.xlu0 %720
        %722 = vrot.lane.b32.xlu0 %v537, 127
        %v723 = vpop.permute.xlu0 %722
        %v724 = vsel %vm301, %v721, %v723
        %v725 = vsel %vm301, %v723, %v721
        %v728 = vcombine.low %v724, %v725
        %v730 = vsub.f32 %v535, %v728
        %v732 = vcombine.high %v730, %v730
        %v734 = vmul.f32 %v640, %v730
        %v735 = vmul.f32 %v644, %v732
        %v736 = vadd.f32 %v724, %v734
        %v737 = vadd.f32 %v725, %v735
        %v738 = vlaneseq
        %v739 = vshrl.u32 %v738, 7
        %v740 = vsub.s32 5, %v739
        %v741 = vrot.slane %v703, %v740
        %v742 = vlaneseq
        %v743 = vshrl.u32 %v742, 7
        %v744 = vsub.s32 5, %v743
        %v745 = vrot.slane %v704, %v744
        %v746 = vmul.f32 %v741, %v736
        %v747 = vmul.f32 %v745, %v737
        %v750 = vcombine.low %v746, %v747
        %v752 = vsub.f32 %v719, %v750
        %753 = vrot.lane.b32.xlu0 %v535, 112
        %v754 = vpop.permute.xlu0 %753
        %755 = vrot.lane.b32.xlu0 %v537, 112
        %v756 = vpop.permute.xlu0 %755
        %v757 = vsel %vm429, %v754, %v756
        %v758 = vsel %vm429, %v756, %v754
        %v759 = vld [vmem:[%s432] ss:$4 sm:$0x3]
        %v762 = vcombine.low %v757, %v758
        %v764 = vsub.f32 %v535, %v762
        %v766 = vlaneseq
        %v767 = vshrl.u32 %v766, 7
        %v768 = vsub.s32 0, %v767
        %v769 = vrot.slane %v759, %v768
        %v770 = vlaneseq
        %v771 = vshrl.u32 %v770, 7
        %v772 = vsub.s32 1, %v771
        %v773 = vrot.slane %v759, %v772
        %v777 = vcombine.high %v764, %v764
        %v779 = vmul.f32 %v769, %v764
        %v780 = vmul.f32 %v773, %v777
        %v781 = vadd.f32 %v757, %v779
        %v782 = vadd.f32 %v758, %v780
        %783 = vrot.lane.b32.xlu0 %v781, 1
        %v784 = vpop.permute.xlu0 %783
        %785 = vrot.lane.b32.xlu0 %v782, 1
        %v786 = vpop.permute.xlu0 %785
        %v787 = vsel %vm242, %v784, %v786
        %v788 = vsel %vm242, %v786, %v784
        %v789 = vsub.f32 %v781, %v788
        %v790 = vsub.f32 %v782, %v787
        %v791 = vmul.f32 %v582, %v789
        %v792 = vmul.f32 %v586, %v790
        %v793 = vadd.f32 %v788, %v791
        %v794 = vadd.f32 %v787, %v792
        %v795 = vld [vmem:[%s593] sm:$0x88]
        %v796 = vunpack.c.l.bf16 %v795
        %v797 = vunpack.c.h.bf16 %v795
        %v798 = vlaneseq
        %v799 = vshrl.u32 %v798, 7
        %v800 = vsub.s32 6, %v799
        %v801 = vrot.slane %v796, %v800
        %v802 = vlaneseq
        %v803 = vshrl.u32 %v802, 7
        %v804 = vsub.s32 6, %v803
        %v805 = vrot.slane %v797, %v804
        %v806 = vmul.f32 %v801, %v793
        %v807 = vmul.f32 %v805, %v794
        %v810 = vcombine.low %v806, %v807
        %v812 = vsub.f32 %v752, %v810
        %v813 = vlaneseq
        %v814 = vshrl.u32 %v813, 7
        %v815 = vsub.s32 7, %v814
        %v816 = vrot.slane %v796, %v815
        %v817 = vlaneseq
        %v818 = vshrl.u32 %v817, 7
        %v819 = vsub.s32 7, %v818
        %v820 = vrot.slane %v797, %v819
        %v821 = vmul.f32 %v816, %v781
        %v822 = vmul.f32 %v820, %v782
        %v825 = vcombine.low %v821, %v822
        %v827 = vsub.f32 %v812, %v825
        %828 = vrot.lane.b32.xlu0 %v781, 127
        %v829 = vpop.permute.xlu0 %828
        %830 = vrot.lane.b32.xlu0 %v782, 127
        %v831 = vpop.permute.xlu0 %830
        %v832 = vsel %vm301, %v829, %v831
        %v833 = vsel %vm301, %v831, %v829
        %v834 = vsub.f32 %v781, %v832
        %v835 = vsub.f32 %v782, %v833
        %v836 = vmul.f32 %v640, %v834
        %v837 = vmul.f32 %v644, %v835
        %v838 = vadd.f32 %v832, %v836
        %v839 = vadd.f32 %v833, %v837
        %v840 = vld [vmem:[%s593 + $0x8] sm:$0x11]
        %v841 = vunpack.c.l.bf16 %v840
        %v842 = vunpack.c.h.bf16 %v840
        %v843 = vlaneseq
        %v844 = vshrl.u32 %v843, 7
        %v845 = vsub.s32 0, %v844
        %v846 = vrot.slane %v841, %v845
        %v847 = vlaneseq
        %v848 = vshrl.u32 %v847, 7
        %v849 = vsub.s32 0, %v848
        %v850 = vrot.slane %v842, %v849
        %v851 = vmul.f32 %v846, %v838
        %v852 = vmul.f32 %v850, %v839
        %v855 = vcombine.low %v851, %v852
        %v857 = vsub.f32 %v827, %v855
        %s858 = scalar_lea.vmem %s184, 8 [#allocation2]
        %859 = vst [vmem:[%s858] sm:$0xff] %v857
        %s860 = sand.u32 %s98, 1
        %s861 = scalar_lea.sflag [#allocation3], %s860
        %s862 = sand.u32 %s98, 1
        %s863 = smul.addr %s862, 16
        %s864 = scalar_lea.vmem [#allocation2], %s863
        // Predicated region
        $region33: #{tpu_custom_call.1} parent=31 // pred_check
          %p865 = pneg %p108
        $region34: #{tpu_custom_call.1} parent=31 // pred_check_branch
          %867 = sbr.rel (%p865) target = $region36
        $region35: #{tpu_custom_call.1} parent=31 // pred_region
          %s868 = smul.u32 2, %s17
          %s870 = ssub.s32 256, 256
          %871 = vsyncadd %s861, %s870
          %s872 = smul.addr %s868, 2
          %s873 = smul.addr %s872, 64
          %s874 = scalar_lea.hbm %s3, %s873
          %s875 = sshll.u32 %s864, 4
          %s876 = int_to_ptr.vmem [resolvable:$true] %s875
          %881 = dma.vmem_to_hbm [thread:$0]  %s876, 256, %s874, %s861, 128, 128, 8
        $region36: #{tpu_custom_call.1} parent=31 // pred_fallthru
          _
      $region32: #{tpu_custom_call.1} parent=5 // pred_fallthru
        _
      %p882 = scmp.le.s32.totalorder 2, %s12
      // Predicated region
      $region37: #{tpu_custom_call.1} parent=5 // pred_check
        %p883 = pneg %p882
      $region38: #{tpu_custom_call.1} parent=5 // pred_check_branch
        %885 = sbr.rel (%p883) target = $region40
      $region39: #{tpu_custom_call.1} parent=5 // pred_region
        %s886 = ssub.s32 %s12, 2
        // Predicated region
        $region41: #{tpu_custom_call.1} parent=39 // pred_check
          %p887 = pneg %p114
        $region42: #{tpu_custom_call.1} parent=39 // pred_check_branch
          %889 = sbr.rel (%p887) target = $region44
        $region43: #{tpu_custom_call.1} parent=39 // pred_region
          %s890 = sand.u32 %s99, 1
          %s891 = scalar_lea.sflag [#allocation3], %s890
          %s892 = sand.u32 %s99, 1
          %s893 = smul.addr %s892, 16
          %s894 = scalar_lea.vmem [#allocation2], %s893
          %895 = dma.done %s891, 256
        $region44: #{tpu_custom_call.1} parent=39 // pred_fallthru
          _
      $region40: #{tpu_custom_call.1} parent=5 // pred_fallthru
        _
    $region6: #{tpu_custom_call.1} parent=1 // loop_footer
      %s16 = sadd.s32 1, %s12
    $region7: #{tpu_custom_call.1} parent=1 // loop_footer_branch
      %11 = sbr.rel target = $region3
    $region8: #{tpu_custom_call.1} parent=1 // loop_exit
      _
    %896 = vsyncpa [#allocation3], 1
    %s897 = scalar_lea.sflag [#allocation3], 1
    %898 = vsyncpa %s897, 1

</llo_original>
